<compile_context>
chip_gen: v6e
topology: v6e:2x2x1
jax: 0.10.0
libtpu: 0.0.40
codegen_flags: <defaults>
</compile_context>

<pallas_src>
import functools

import jax
import jax.numpy as jnp
from jax.experimental import pallas as pl
from jax.experimental.pallas import tpu as pltpu


def _round_up(x, m):
    return ((x + m - 1) // m) * m


# --------------------------------------------------------------------------
# small path: whole (padded) problem resident in VMEM, grid=()
# --------------------------------------------------------------------------

def _linear_small_bias_kernel(x_ref, w_ref, b_ref, o_ref):
    # x: (Mp, Kp), w: (Kp, Np) pre-transposed, b: (1, Np) f32
    acc = jnp.dot(x_ref[...], w_ref[...], preferred_element_type=jnp.float32)
    o_ref[...] = (acc + b_ref[...]).astype(o_ref.dtype)


def _linear_small_kernel(x_ref, w_ref, o_ref):
    acc = jnp.dot(x_ref[...], w_ref[...], preferred_element_type=jnp.float32)
    o_ref[...] = acc.astype(o_ref.dtype)


# --------------------------------------------------------------------------
# tiled path: (M//tm, N//tn, K//tk) grid, f32 accumulator, pl.when epilogue
# --------------------------------------------------------------------------

def _linear_tiled_bias_kernel(x_ref, w_ref, b_ref, o_ref, acc_ref):
    k = pl.program_id(2)

    @pl.when(k == 0)
    def _():
        acc_ref[...] = jnp.zeros_like(acc_ref)

    acc_ref[...] += jnp.dot(x_ref[...], w_ref[...],
                            preferred_element_type=jnp.float32)

    @pl.when(k == pl.num_programs(2) - 1)
    def _():
        # bias add / epilogue kept in f32 (v5e has no bf16 VPU)
        o_ref[...] = (acc_ref[...] + b_ref[...]).astype(o_ref.dtype)


def _linear_tiled_kernel(x_ref, w_ref, o_ref, acc_ref):
    k = pl.program_id(2)

    @pl.when(k == 0)
    def _():
        acc_ref[...] = jnp.zeros_like(acc_ref)

    acc_ref[...] += jnp.dot(x_ref[...], w_ref[...],
                            preferred_element_type=jnp.float32)

    @pl.when(k == pl.num_programs(2) - 1)
    def _():
        o_ref[...] = acc_ref[...].astype(o_ref.dtype)


# --------------------------------------------------------------------------
# wrapper
# --------------------------------------------------------------------------

# If the (padded) operands fit comfortably in VMEM, skip the grid entirely.
_SMALL_VMEM_BYTES = 4 * 1024 * 1024

# Default tile sizes: 256-aligned M/N tiles match the v6e/v7x 2x256^2 MXU;
# on v5e (4x128^2 MXU, 16 MiB scoped VMEM) pass tm=tn=128 instead.
_DEF_TM, _DEF_TN, _DEF_TK = 256, 256, 512


@functools.partial(jax.jit, static_argnames=("bf16_inputs", "tm", "tn", "tk"))
def pallas_linear(x, w_t, b=None, *, bf16_inputs=False,
                  tm=_DEF_TM, tn=_DEF_TN, tk=_DEF_TK):
    """y = x @ w_t (+ b), with w_t already transposed to (input, output)."""
    B, K = x.shape
    K2, N = w_t.shape
    assert K == K2, (K, K2)
    has_bias = b is not None
    out_dtype = x.dtype

    if bf16_inputs:
        # bf16 operands for the MXU; accumulation & bias epilogue stay f32.
        x = x.astype(jnp.bfloat16)
        w_t = w_t.astype(jnp.bfloat16)
    if has_bias:
        b = b.astype(jnp.float32)

    # ---- lane-dense padding & tile selection --------------------------------
    tm_e = min(tm, _round_up(B, 8))
    tn_e = min(tn, _round_up(N, 128))
    tk_e = min(tk, _round_up(K, 128))
    Mp = _round_up(B, tm_e)
    Np = _round_up(N, tn_e)
    Kp = _round_up(K, tk_e)

    in_itemsize = jnp.dtype(x.dtype).itemsize
    out_itemsize = jnp.dtype(out_dtype).itemsize
    total_bytes = ((Mp * Kp + Kp * Np) * in_itemsize
                   + Mp * Np * out_itemsize
                   + (Np * 4 if has_bias else 0))

    xp = jnp.pad(x, ((0, Mp - B), (0, Kp - K)))
    wp = jnp.pad(w_t, ((0, Kp - K), (0, Np - N)))
    bp = jnp.pad(b, ((0, 0), (0, Np - N))) if has_bias else None

    cost = pl.CostEstimate(
        flops=2 * Mp * Np * Kp,
        transcendentals=0,
        bytes_accessed=(Mp * Kp + Kp * Np) * in_itemsize + Mp * Np * out_itemsize,
    )
    out_shape = jax.ShapeDtypeStruct((Mp, Np), out_dtype)

    if total_bytes <= _SMALL_VMEM_BYTES:
        # -------- small fast path: grid=(), fully VMEM-resident --------------
        vmem = pl.BlockSpec(memory_space=pltpu.MemorySpace.VMEM)
        if has_bias:
            y = pl.pallas_call(
                _linear_small_bias_kernel,
                out_shape=out_shape,
                in_specs=[vmem, vmem, vmem],
                out_specs=vmem,
                cost_estimate=cost,
            )(xp, wp, bp)
        else:
            y = pl.pallas_call(
                _linear_small_kernel,
                out_shape=out_shape,
                in_specs=[vmem, vmem],
                out_specs=vmem,
                cost_estimate=cost,
            )(xp, wp)
    else:
        # -------- tiled, software-pipelined path ------------------------------
        grid = (Mp // tm_e, Np // tn_e, Kp // tk_e)
        x_spec = pl.BlockSpec((tm_e, tk_e), lambda i, j, k: (i, k))
        w_spec = pl.BlockSpec((tk_e, tn_e), lambda i, j, k: (k, j))
        b_spec = pl.BlockSpec((1, tn_e), lambda i, j, k: (0, j))
        o_spec = pl.BlockSpec((tm_e, tn_e), lambda i, j, k: (i, j))
        scratch = [pltpu.VMEM((tm_e, tn_e), jnp.float32)]
        cparams = pltpu.CompilerParams(
            dimension_semantics=("parallel", "parallel", "arbitrary"))
        if has_bias:
            y = pl.pallas_call(
                _linear_tiled_bias_kernel,
                out_shape=out_shape,
                grid_spec=pltpu.PrefetchScalarGridSpec(
                    num_scalar_prefetch=0, grid=grid,
                    in_specs=[x_spec, w_spec, b_spec],
                    out_specs=o_spec, scratch_shapes=scratch),
                compiler_params=cparams,
                cost_estimate=cost,
            )(xp, wp, bp)
        else:
            y = pl.pallas_call(
                _linear_tiled_kernel,
                out_shape=out_shape,
                grid_spec=pltpu.PrefetchScalarGridSpec(
                    num_scalar_prefetch=0, grid=grid,
                    in_specs=[x_spec, w_spec],
                    out_specs=o_spec, scratch_shapes=scratch),
                compiler_params=cparams,
                cost_estimate=cost,
            )(xp, wp)

    return y[:B, :N]


# --------------------------------------------------------------------------
# module
# --------------------------------------------------------------------------

class LinearConnector:
    """JAX/Pallas port of the PyTorch LinearConnector module.

    Weights are created PyTorch-style (output_size, input_size) for get_w()
    parity, but the compute path keeps a pre-transposed (input_size,
    output_size) copy so the kernel never transposes.  In LSTM mode the h/c
    projections are fused into a single (I, 2*O) matmul and split afterwards.
    """

    def __init__(self, input_size, output_size, is_lstm, has_bias=True, *,
                 key, use_bf16=False):
        self.is_lstm = is_lstm
        self.has_bias = has_bias
        self.use_bf16 = use_bf16
        self.output_size = output_size
        bound = 1.0 / (input_size ** 0.5)  # nn.Linear default init range

        def make_params(k):
            kw, kb = jax.random.split(k)
            w = jax.random.uniform(kw, (output_size, input_size),
                                   jnp.float32, -bound, bound)
            b = (jax.random.uniform(kb, (1, output_size),
                                    jnp.float32, -bound, bound)
                 if has_bias else None)
            return w, b

        if is_lstm:
            kh, kc = jax.random.split(key)
            self.w_h, self.b_h = make_params(kh)
            self.w_c, self.b_c = make_params(kc)
            # fused, pre-transposed (I, 2*O) weight; split after the matmul
            self.w_hc_t = jnp.concatenate([self.w_h.T, self.w_c.T], axis=1)
            self.b_hc = (jnp.concatenate([self.b_h, self.b_c], axis=1)
                         if has_bias else None)
        else:
            self.w, self.b = make_params(key)
            self.w_t = self.w.T

    def __call__(self, inputs):
        # inputs: (batch, input_size)
        O = self.output_size
        if self.is_lstm:
            y = pallas_linear(inputs, self.w_hc_t, self.b_hc,
                              bf16_inputs=self.use_bf16)
            h, c = y[:, :O], y[:, O:]
            return (h[None, ...], c[None, ...])   # unsqueeze(0)
        else:
            y = pallas_linear(inputs, self.w_t, self.b,
                              bf16_inputs=self.use_bf16)
            return y[None, ...]                   # unsqueeze(0)

    def get_w(self):
        return self.w_h if self.is_lstm else self.w


if __name__ == "__main__":
    key = jax.random.PRNGKey(0)
    k_in, k_lstm, k_gru, k_big_in, k_big = jax.random.split(key, 5)

    # ---- small shapes consistent with the module (batch x input_size) -------
    batch, input_size, output_size = 2, 32, 32
    x = jax.random.normal(k_in, (batch, input_size), jnp.float32)

    # LSTM case: returns (h, c), each (1, batch, output_size) -- fused kernel.
    conn_lstm = LinearConnector(input_size, output_size, is_lstm=True, key=k_lstm)
    h, c = conn_lstm(x)
    h = jax.block_until_ready(h)
    c = jax.block_until_ready(c)

    # non-LSTM case: returns (1, batch, output_size)
    conn = LinearConnector(input_size, output_size, is_lstm=False, key=k_gru)
    y = jax.block_until_ready(conn(x))

    ref_h = (x @ conn_lstm.w_h.T + conn_lstm.b_h)[None, ...]
    ref_c = (x @ conn_lstm.w_c.T + conn_lstm.b_c)[None, ...]
    ref_y = (x @ conn.w.T + conn.b)[None, ...]
    assert h.shape == (1, batch, output_size)
    assert c.shape == (1, batch, output_size)
    assert y.shape == (1, batch, output_size)
    assert jnp.allclose(h, ref_h, atol=1e-5)
    assert jnp.allclose(c, ref_c, atol=1e-5)
    assert jnp.allclose(y, ref_y, atol=1e-5)

    # ---- moderate shapes to exercise the tiled / pipelined path --------------
    Bb, Ib, Ob = 256, 2048, 512
    xb = jax.random.normal(k_big_in, (Bb, Ib), jnp.float32)
    conn_big = LinearConnector(Ib, Ob, is_lstm=False, key=k_big)
    yb = jax.block_until_ready(conn_big(xb))
    ref_yb = (jnp.dot(xb, conn_big.w.T, precision=jax.lax.Precision.HIGHEST)
              + conn_big.b)[None, ...]
    assert yb.shape == (1, Bb, Ob)
    assert jnp.allclose(yb, ref_yb, rtol=1e-3, atol=1e-3)

    print("KERNEL_OK")
</pallas_src>

<mosaic_0001>
module attributes {stable_mosaic.version = 11 : i64} {
  func.func @_linear_small_bias_kernel(%arg0: memref<8x128xf32, #tpu.memory_space<vmem>>, %arg1: memref<128x128xf32, #tpu.memory_space<vmem>>, %arg2: memref<1x128xf32, #tpu.memory_space<vmem>>, %arg3: memref<8x128xf32, #tpu.memory_space<vmem>>) attributes {dimension_semantics = [], scalar_prefetch = 0 : i64, scratch_operands = 0 : i64, tpu.core_type = #tpu.core_type<tc>} {
    %c0 = arith.constant 0 : index
    %c0_0 = arith.constant 0 : index
    %0 = vector.load %arg0[%c0, %c0_0] : memref<8x128xf32, #tpu.memory_space<vmem>>, vector<8x128xf32>
    %c0_1 = arith.constant 0 : index
    %c0_2 = arith.constant 0 : index
    %1 = vector.load %arg1[%c0_1, %c0_2] : memref<128x128xf32, #tpu.memory_space<vmem>>, vector<128x128xf32>
    %cst = arith.constant dense<0.000000e+00> : vector<8x128xf32>
    %2 = tpu.matmul %0, %1, %cst {dimension_numbers = #tpu.dot_dimension_numbers<[1], [0], [0], [1], [0, 0, 1, 1], [], []>} : vector<8x128xf32>, vector<128x128xf32>, vector<8x128xf32> -> vector<8x128xf32>
    %c0_3 = arith.constant 0 : index
    %c0_4 = arith.constant 0 : index
    %3 = vector.load %arg2[%c0_3, %c0_4] : memref<1x128xf32, #tpu.memory_space<vmem>>, vector<1x128xf32>
    %4 = vector.broadcast %3 : vector<1x128xf32> to vector<8x128xf32>
    %5 = arith.addf %2, %4 : vector<8x128xf32>
    %c0_5 = arith.constant 0 : index
    %c0_6 = arith.constant 0 : index
    %6 = vector.load %arg3[%c0_5, %c0_6] : memref<8x128xf32, #tpu.memory_space<vmem>>, vector<8x128xf32>
    tpu.vector_store %arg3[%c0_5, %c0_6], %5 {strides = array<i32>} : memref<8x128xf32, #tpu.memory_space<vmem>>, vector<8x128xf32>,
    return
  }
}

</mosaic_0001>

<llo_original>
// kernel: pallas_linear.1
$region0: #{pallas_linear.1}
  #allocation0 [shape = 'u32[]', space=smem, size = 0x4, offset = 0x4, fixed_abs, tag = 'smem constant byte address 0x4 - core index']
  #allocation1 [shape = 'u32[144,128]{1,0:T(1,128)}', space=vmem, size = 0x12000, scoped, tag = 'internal scratch']
  %s0 = inlined_call_operand.vmem [shape: f32[8,128], index: 0, kind: input, shape index: {}]
  %s1 = inlined_call_operand.vmem [shape: f32[128,128], index: 1, kind: input, shape index: {}]
  %s2 = inlined_call_operand.vmem [shape: f32[1,128], index: 2, kind: input, shape index: {}]
  %s3 = inlined_call_operand.vmem [shape: f32[8,128], index: 3, kind: output, shape index: {}]
  %s4 = sld [smem:[#allocation0]]
  $region22: #{pallas_linear.1} parent=0
    _
  %s6 = ssub.s32 1, %s4
  %s7 = scalar_select 0, %s6, %s4
  // Predicated region
  $region2: #{pallas_linear.1} parent=0 // pred_check
    _
  $region3: #{pallas_linear.1} parent=0 // pred_check_branch
    %9 = sbr.rel (0) target = $region5
  $region4: #{pallas_linear.1} parent=0 // pred_region
    _
  $region5: #{pallas_linear.1} parent=0 // pred_fallthru
    _
  // Predicated region
  $region6: #{pallas_linear.1} parent=0 // pred_check
    _
  $region7: #{pallas_linear.1} parent=0 // pred_check_branch
    %11 = sbr.rel (0) target = $region9
  $region8: #{pallas_linear.1} parent=0 // pred_region
    _
  $region9: #{pallas_linear.1} parent=0 // pred_fallthru
    _
  // Predicated region
  $region10: #{pallas_linear.1} parent=0 // pred_check
    _
  $region11: #{pallas_linear.1} parent=0 // pred_check_branch
    %13 = sbr.rel (0) target = $region13
  $region12: #{pallas_linear.1} parent=0 // pred_region
    _
  $region13: #{pallas_linear.1} parent=0 // pred_fallthru
    _
  %v14 = vld [vmem:[%s0] sm:$0xff]
  %v15 = vld [vmem:[%s1] sm:$0xff]
  %v16 = vld [vmem:[%s1 + $0x8] sm:$0xff]
  %v17 = vld [vmem:[%s1 + $0x10] sm:$0xff]
  %v18 = vld [vmem:[%s1 + $0x18] sm:$0xff]
  %v19 = vld [vmem:[%s1 + $0x20] sm:$0xff]
  %v20 = vld [vmem:[%s1 + $0x28] sm:$0xff]
  %v21 = vld [vmem:[%s1 + $0x30] sm:$0xff]
  %v22 = vld [vmem:[%s1 + $0x38] sm:$0xff]
  %v23 = vld [vmem:[%s1 + $0x40] sm:$0xff]
  %v24 = vld [vmem:[%s1 + $0x48] sm:$0xff]
  %v25 = vld [vmem:[%s1 + $0x50] sm:$0xff]
  %v26 = vld [vmem:[%s1 + $0x58] sm:$0xff]
  %v27 = vld [vmem:[%s1 + $0x60] sm:$0xff]
  %v28 = vld [vmem:[%s1 + $0x68] sm:$0xff]
  %v29 = vld [vmem:[%s1 + $0x70] sm:$0xff]
  %v30 = vld [vmem:[%s1 + $0x78] sm:$0xff]
  %v31 = vld [vmem:[%s2] sm:$0x1]
  %v33 = vlaneseq
  %v34 = vshrl.u32 %v33, 7
  %v35 = vsub.s32 0, %v34
  %v36 = vrot.slane %v31, %v35
  %38 = vmatprep.subr.mxu0 0.0
  %39 = vmatpush1.msra.mxu0 %v30
  %40 = vmatprep.subr.mxu0 0.0
  %41 = vmatpush1.msra.mxu0 %v29
  %42 = vmatprep.subr.mxu0 0.0
  %43 = vmatpush1.msra.mxu0 %v28
  %44 = vmatprep.subr.mxu0 0.0
  %45 = vmatpush1.msra.mxu0 %v27
  %46 = vmatprep.subr.mxu0 0.0
  %47 = vmatpush1.msra.mxu0 %v26
  %48 = vmatprep.subr.mxu0 0.0
  %49 = vmatpush1.msra.mxu0 %v25
  %50 = vmatprep.subr.mxu0 0.0
  %51 = vmatpush1.msra.mxu0 %v24
  %52 = vmatprep.subr.mxu0 0.0
  %53 = vmatpush1.msra.mxu0 %v23
  %54 = vmatprep.subr.mxu0 0.0
  %55 = vmatpush1.msra.mxu0 %v22
  %56 = vmatprep.subr.mxu0 0.0
  %57 = vmatpush1.msra.mxu0 %v21
  %58 = vmatprep.subr.mxu0 0.0
  %59 = vmatpush1.msra.mxu0 %v20
  %60 = vmatprep.subr.mxu0 0.0
  %61 = vmatpush1.msra.mxu0 %v19
  %62 = vmatprep.subr.mxu0 0.0
  %63 = vmatpush1.msra.mxu0 %v18
  %64 = vmatprep.subr.mxu0 0.0
  %65 = vmatpush1.msra.mxu0 %v17
  %66 = vmatprep.subr.mxu0 0.0
  %67 = vmatpush1.msra.mxu0 %v16
  %68 = vmatprep.subr.mxu0 0.0
  %69 = vmatpush1.msra.mxu0 %v15
  %70 = vmatprep.subr.mxu0 0.0
  %71 = vmatpush2.msra.mxu0 0.0
  %72 = vmatprep.subr.mxu0 0.0
  %73 = vmatpush2.msra.mxu0 0.0
  %74 = vmatprep.subr.mxu0 0.0
  %75 = vmatpush2.msra.mxu0 0.0
  %76 = vmatprep.subr.mxu0 0.0
  %77 = vmatpush2.msra.mxu0 0.0
  %78 = vmatprep.subr.mxu0 0.0
  %79 = vmatpush2.msra.mxu0 0.0
  %80 = vmatprep.subr.mxu0 0.0
  %81 = vmatpush2.msra.mxu0 0.0
  %82 = vmatprep.subr.mxu0 0.0
  %83 = vmatpush2.msra.mxu0 0.0
  %84 = vmatprep.subr.mxu0 0.0
  %85 = vmatpush2.msra.mxu0 0.0
  %86 = vmatprep.subr.mxu0 0.0
  %87 = vmatpush2.msra.mxu0 0.0
  %88 = vmatprep.subr.mxu0 0.0
  %89 = vmatpush2.msra.mxu0 0.0
  %90 = vmatprep.subr.mxu0 0.0
  %91 = vmatpush2.msra.mxu0 0.0
  %92 = vmatprep.subr.mxu0 0.0
  %93 = vmatpush2.msra.mxu0 0.0
  %94 = vmatprep.subr.mxu0 0.0
  %95 = vmatpush2.msra.mxu0 0.0
  %96 = vmatprep.subr.mxu0 0.0
  %97 = vmatpush2.msra.mxu0 0.0
  %98 = vmatprep.subr.mxu0 0.0
  %99 = vmatpush2.msra.mxu0 0.0
  %100 = vmatprep.subr.mxu0 0.0
  %101 = vmatpush2.msra.mxu0 0.0
  %102 = vmatprep.mubr.f32.mxu0 0.0
  %103 = vmatmul.mubr.f32.gmra.mxu0 %v14
  %v104 = vpop.f32.mrf.mxu0
  %v105 = vadd.f32 %v36, %v104
  %v106 = vpop.f32.mrf.mxu0
  %107 = vdwg.mxu0
  %108 = vst [vmem:[%s3] sm:$0xff] %v105
  // Predicated region
  $region14: #{pallas_linear.1} parent=0 // pred_check
    _
  $region15: #{pallas_linear.1} parent=0 // pred_check_branch
    %110 = sbr.rel (0) target = $region17
  $region16: #{pallas_linear.1} parent=0 // pred_region
    _
  $region17: #{pallas_linear.1} parent=0 // pred_fallthru
    _
  // Predicated region
  $region18: #{pallas_linear.1} parent=0 // pred_check
    _
  $region19: #{pallas_linear.1} parent=0 // pred_check_branch
    %112 = sbr.rel (0) target = $region21
  $region20: #{pallas_linear.1} parent=0 // pred_region
    _
  $region21: #{pallas_linear.1} parent=0 // pred_fallthru
    _

</llo_original>
